<compile_context>
chip_gen: v5e
topology: v5e:2x2
jax: 0.10.0
libtpu: 0.0.40
codegen_flags: <defaults>
</compile_context>

<pallas_src>
import jax
import jax.numpy as jnp
from jax.experimental import pallas as pl
from jax.experimental.pallas import tpu as pltpu


def _round_up(x, m):
    return ((x + m - 1) // m) * m


def branch_leaf_kernel(xm_ref, x1_ref, x2_ref,
                       wa_ref, ba_ref, w3m_ref, w3a_ref, b3_ref,
                       out_ref):
    """One batch tile: 3-way attention softmax fusion + split K=A output matmuls."""
    f32 = jnp.float32
    xm = xm_ref[...].astype(f32)                      # (TB, A)
    x1 = x1_ref[...].astype(f32)
    x2 = x2_ref[...].astype(f32)
    wa = wa_ref[...]                                  # (3, A), f32

    # attention scores (TB, 1): x_j @ attention_j.weight.T + attention_j.bias
    s0 = jnp.sum(xm * wa[0:1, :], axis=-1, keepdims=True) + ba_ref[0]
    s1 = jnp.sum(x1 * wa[1:2, :], axis=-1, keepdims=True) + ba_ref[1]
    s2 = jnp.sum(x2 * wa[2:3, :], axis=-1, keepdims=True) + ba_ref[2]

    # stable softmax over the 3 scores (dim=1 in the PyTorch code).
    # Exact reciprocal: denominator is bounded in [1, 3]; keeps parity with
    # the f32 PyTorch forward and costs essentially nothing here.
    m = jnp.maximum(jnp.maximum(s0, s1), s2)
    e0 = jnp.exp(s0 - m)
    e1 = jnp.exp(s1 - m)
    e2 = jnp.exp(s2 - m)
    inv = pl.reciprocal(e0 + e1 + e2, approx=False)
    w0, w1, w2 = e0 * inv, e1 * inv, e2 * inv         # each (TB, 1)

    # bmm(inputs, weights) == per-row convex combination of the three inputs
    att = w0 * xm + w1 * x1 + w2 * x2                 # (TB, A)

    # layer3(concat([x_main, att], dim=1)) without a lane-axis concat:
    # two K=A MXU matmuls against the pre-split, pre-transposed weight halves.
    wdt = w3m_ref.dtype
    acc = (jnp.dot(xm.astype(wdt), w3m_ref[...], preferred_element_type=f32)
           + jnp.dot(att.astype(wdt), w3a_ref[...], preferred_element_type=f32))
    # Store only the real C columns (out_ref's last dim == full array dim C);
    # the lane-dense c_pad width lives only in VMEM/vregs.
    c = out_ref.shape[-1]
    out = acc[:, :c] + b3_ref[...].astype(f32)        # (TB, C)
    out_ref[...] = out.astype(out_ref.dtype)


def prepare_params(params, *, compute_dtype=jnp.float32):
    """One-time weight prep, hoisted out of the per-call forward path.

    Splits layer3's weight into two pre-transposed (A, c_pad) halves (main /
    attention parts of the concat), padded to a lane-dense multiple of 128.
    compute_dtype applies ONLY to these VMEM-resident weights (bf16 on v6e/v7x
    hits the native MXU path); activations are never downcast in the wrapper.
    """
    wa = params["wa"].astype(jnp.float32)             # (3, A)
    ba = params["ba"].astype(jnp.float32)             # (3,)
    w3 = params["w3"]                                 # (C, 2A)
    b3 = params["b3"]                                 # (C,)
    C, two_a = w3.shape
    A = two_a // 2
    c_pad = _round_up(C, 128)
    w3m = jnp.zeros((A, c_pad), compute_dtype).at[:, :C].set(
        w3[:, :A].T.astype(compute_dtype))            # multiplies x_main
    w3a = jnp.zeros((A, c_pad), compute_dtype).at[:, :C].set(
        w3[:, A:].T.astype(compute_dtype))            # multiplies attention_output
    b3r = b3.astype(jnp.float32).reshape(1, C)
    return {"wa": wa, "ba": ba, "w3m": w3m, "w3a": w3a, "b3": b3r,
            "A": A, "C": C, "C_pad": c_pad, "compute_dtype": compute_dtype}


def branch_leaf_forward(x_main, x_other1, x_other2, prep, *,
                        block_b=4096, vmem_limit_bytes=48 * 1024 * 1024):
    B, A = x_main.shape
    assert A == prep["A"]
    C, c_pad = prep["C"], prep["C_pad"]
    out_dtype = x_main.dtype

    # Batch tile: largest multiple of 8 up to block_b; ragged B handled by a
    # cdiv grid (partial last block's writes are clipped by Pallas — no pad).
    tb = _round_up(min(block_b, B), 8)
    grid = (pl.cdiv(B, tb),)

    x_spec = pl.BlockSpec((tb, A), lambda i: (i, 0))
    wa_spec = pl.BlockSpec((3, A), lambda i: (0, 0))             # VMEM-resident
    ba_spec = pl.BlockSpec(memory_space=pltpu.MemorySpace.SMEM)  # scalar biases
    w3_spec = pl.BlockSpec((A, c_pad), lambda i: (0, 0))         # VMEM-resident
    b3_spec = pl.BlockSpec((1, C), lambda i: (0, 0))
    out_spec = pl.BlockSpec((tb, C), lambda i: (i, 0))           # unpadded store

    x_bytes = jnp.dtype(x_main.dtype).itemsize
    w_bytes = jnp.dtype(prep["compute_dtype"]).itemsize
    out_bytes = jnp.dtype(out_dtype).itemsize
    cost = pl.CostEstimate(
        flops=4 * B * A * c_pad + 12 * B * A,
        transcendentals=3 * B,
        bytes_accessed=(3 * B * A * x_bytes            # activations in
                        + B * C * out_bytes            # unpadded output
                        + 2 * A * c_pad * w_bytes      # layer3 weight halves
                        + (3 * A + 3 + C) * 4),        # attention weights/biases
    )

    return pl.pallas_call(
        branch_leaf_kernel,
        out_shape=jax.ShapeDtypeStruct((B, C), out_dtype),
        grid=grid,
        in_specs=[x_spec, x_spec, x_spec, wa_spec, ba_spec,
                  w3_spec, w3_spec, b3_spec],
        out_specs=out_spec,
        compiler_params=pltpu.CompilerParams(
            dimension_semantics=("parallel",),
            vmem_limit_bytes=vmem_limit_bytes),
        cost_estimate=cost,
    )(x_main, x_other1, x_other2,
      prep["wa"], prep["ba"], prep["w3m"], prep["w3a"], prep["b3"])


def branch_leaf_ref(x_main, x_other1, x_other2, params):
    """Pure-JAX reference mirroring the PyTorch forward."""
    wa, ba, w3, b3 = params["wa"], params["ba"], params["w3"], params["b3"]
    s = jnp.stack([x_main   @ wa[0] + ba[0],
                   x_other1 @ wa[1] + ba[1],
                   x_other2 @ wa[2] + ba[2]], axis=-1)          # (B, 3)
    w = jax.nn.softmax(s, axis=1)[..., None]                    # (B, 3, 1)
    inputs = jnp.stack([x_main, x_other1, x_other2], axis=-1)   # (B, A, 3)
    att = jnp.squeeze(jnp.matmul(inputs, w), axis=-1)           # (B, A)
    return jnp.concatenate([x_main, att], axis=1) @ w3.T + b3   # (B, C)


def init_params(key, attention_size, num_classes):
    """Deterministic Linear-style init (uniform(-1/sqrt(fan_in), +...))."""
    k = jax.random.split(key, 4)
    A, C = attention_size, num_classes
    a_bound = 1.0 / jnp.sqrt(A)
    b_bound = 1.0 / jnp.sqrt(2 * A)
    return {
        "wa": jax.random.uniform(k[0], (3, A), jnp.float32, -a_bound, a_bound),
        "ba": jax.random.uniform(k[1], (3,), jnp.float32, -a_bound, a_bound),
        "w3": jax.random.uniform(k[2], (C, 2 * A), jnp.float32, -b_bound, b_bound),
        "b3": jax.random.uniform(k[3], (C,), jnp.float32, -b_bound, b_bound),
    }


if __name__ == "__main__":
    B, A, C = 8, 32, 8   # batch, attention_size, num_classes

    key = jax.random.PRNGKey(0)
    kx, kp = jax.random.split(key)
    kxm, kx1, kx2 = jax.random.split(kx, 3)

    x_main = jax.random.normal(kxm, (B, A), jnp.float32)
    x_other1 = jax.random.normal(kx1, (B, A), jnp.float32)
    x_other2 = jax.random.normal(kx2, (B, A), jnp.float32)
    params = init_params(kp, A, C)

    # One-time weight prep (transpose / split / pad hoisted out of forward).
    # On v6e/v7x pass compute_dtype=jnp.bfloat16 (weights-only bf16 MXU path).
    prep = prepare_params(params, compute_dtype=jnp.float32)

    out = branch_leaf_forward(x_main, x_other1, x_other2, prep)
    out = jax.block_until_ready(out)

    ref = branch_leaf_ref(x_main, x_other1, x_other2, params)
    assert out.shape == (B, C)
    assert jnp.allclose(out, ref, atol=1e-4, rtol=1e-4), "mismatch vs reference"

    # TODO(synk): attention4 is declared in __init__ but never used in forward; omitted.
    # TODO(synk): if the producer can emit a single stacked (B, 3, A) input, a
    # one-DMA-per-step variant would further improve lane utilization.
    print("KERNEL_OK")
</pallas_src>

<mosaic_0001>
module attributes {stable_mosaic.version = 11 : i64} {
  func.func @branch_leaf_kernel(%arg0: i32, %arg1: memref<8x32xf32, #tpu.memory_space<vmem>>, %arg2: memref<8x32xf32, #tpu.memory_space<vmem>>, %arg3: memref<8x32xf32, #tpu.memory_space<vmem>>, %arg4: memref<3x32xf32, #tpu.memory_space<vmem>>, %arg5: memref<3xf32, #tpu.memory_space<smem>>, %arg6: memref<32x128xf32, #tpu.memory_space<vmem>>, %arg7: memref<32x128xf32, #tpu.memory_space<vmem>>, %arg8: memref<1x8xf32, #tpu.memory_space<vmem>>, %arg9: memref<8x8xf32, #tpu.memory_space<vmem>>) attributes {dimension_semantics = [#tpu.dimension_semantics<parallel>], iteration_bounds = array<i64: 1>, scalar_prefetch = 0 : i64, scratch_operands = 0 : i64, tpu.core_type = #tpu.core_type<tc>, window_params = [{transform_indices = @transform_0, window_bounds = array<i64: 8, 32>}, {transform_indices = @transform_1, window_bounds = array<i64: 8, 32>}, {transform_indices = @transform_2, window_bounds = array<i64: 8, 32>}, {pipeline_mode = #tpu.pipeline_mode<synchronous>, transform_indices = @transform_3, window_bounds = array<i64: 3, 32>}, {transform_indices = @transform_4, window_bounds = array<i64: 3>}, {pipeline_mode = #tpu.pipeline_mode<synchronous>, transform_indices = @transform_5, window_bounds = array<i64: 32, 128>}, {pipeline_mode = #tpu.pipeline_mode<synchronous>, transform_indices = @transform_6, window_bounds = array<i64: 32, 128>}, {pipeline_mode = #tpu.pipeline_mode<synchronous>, transform_indices = @transform_7, window_bounds = array<i64: 1, 8>}, {transform_indices = @transform_8, window_bounds = array<i64: 8, 8>}]} {
    %c0 = arith.constant 0 : index
    %c0_0 = arith.constant 0 : index
    %0 = vector.load %arg1[%c0, %c0_0] : memref<8x32xf32, #tpu.memory_space<vmem>>, vector<8x32xf32>
    %c0_1 = arith.constant 0 : index
    %c0_2 = arith.constant 0 : index
    %1 = vector.load %arg2[%c0_1, %c0_2] : memref<8x32xf32, #tpu.memory_space<vmem>>, vector<8x32xf32>
    %c0_3 = arith.constant 0 : index
    %c0_4 = arith.constant 0 : index
    %2 = vector.load %arg3[%c0_3, %c0_4] : memref<8x32xf32, #tpu.memory_space<vmem>>, vector<8x32xf32>
    %c0_5 = arith.constant 0 : index
    %c0_6 = arith.constant 0 : index
    %3 = vector.load %arg4[%c0_5, %c0_6] : memref<3x32xf32, #tpu.memory_space<vmem>>, vector<3x32xf32>
    %4 = vector.extract_strided_slice %3 {offsets = [0, 0], sizes = [1, 32], strides = [1, 1]} : vector<3x32xf32> to vector<1x32xf32>
    %5 = vector.broadcast %4 : vector<1x32xf32> to vector<8x32xf32>
    %6 = arith.mulf %0, %5 : vector<8x32xf32>
    %cst = arith.constant dense<0.000000e+00> : vector<8xf32>
    %7 = vector.multi_reduction <add>, %6, %cst [1] : vector<8x32xf32> to vector<8xf32>
    %8 = vector.shape_cast %7 : vector<8xf32> to vector<8x1xf32>
    %c0_7 = arith.constant 0 : index
    %9 = memref.load %arg5[%c0_7] : memref<3xf32, #tpu.memory_space<smem>>
    %10 = vector.broadcast %9 : f32 to vector<8x1xf32>
    %11 = arith.addf %8, %10 : vector<8x1xf32>
    %12 = vector.extract_strided_slice %3 {offsets = [1, 0], sizes = [1, 32], strides = [1, 1]} : vector<3x32xf32> to vector<1x32xf32>
    %13 = vector.broadcast %12 : vector<1x32xf32> to vector<8x32xf32>
    %14 = arith.mulf %1, %13 : vector<8x32xf32>
    %cst_8 = arith.constant dense<0.000000e+00> : vector<8xf32>
    %15 = vector.multi_reduction <add>, %14, %cst_8 [1] : vector<8x32xf32> to vector<8xf32>
    %16 = vector.shape_cast %15 : vector<8xf32> to vector<8x1xf32>
    %c1 = arith.constant 1 : index
    %17 = memref.load %arg5[%c1] : memref<3xf32, #tpu.memory_space<smem>>
    %18 = vector.broadcast %17 : f32 to vector<8x1xf32>
    %19 = arith.addf %16, %18 : vector<8x1xf32>
    %20 = vector.extract_strided_slice %3 {offsets = [2, 0], sizes = [1, 32], strides = [1, 1]} : vector<3x32xf32> to vector<1x32xf32>
    %21 = vector.broadcast %20 : vector<1x32xf32> to vector<8x32xf32>
    %22 = arith.mulf %2, %21 : vector<8x32xf32>
    %cst_9 = arith.constant dense<0.000000e+00> : vector<8xf32>
    %23 = vector.multi_reduction <add>, %22, %cst_9 [1] : vector<8x32xf32> to vector<8xf32>
    %24 = vector.shape_cast %23 : vector<8xf32> to vector<8x1xf32>
    %c2 = arith.constant 2 : index
    %25 = memref.load %arg5[%c2] : memref<3xf32, #tpu.memory_space<smem>>
    %26 = vector.broadcast %25 : f32 to vector<8x1xf32>
    %27 = arith.addf %24, %26 : vector<8x1xf32>
    %28 = arith.maximumf %11, %19 : vector<8x1xf32>
    %29 = arith.maximumf %28, %27 : vector<8x1xf32>
    %30 = arith.subf %11, %29 : vector<8x1xf32>
    %31 = math.exp %30 : vector<8x1xf32>
    %32 = arith.subf %19, %29 : vector<8x1xf32>
    %33 = math.exp %32 : vector<8x1xf32>
    %34 = arith.subf %27, %29 : vector<8x1xf32>
    %35 = math.exp %34 : vector<8x1xf32>
    %36 = arith.addf %31, %33 : vector<8x1xf32>
    %37 = arith.addf %36, %35 : vector<8x1xf32>
    %38 = tpu.reciprocal %37 : vector<8x1xf32> -> vector<8x1xf32>
    %39 = arith.mulf %31, %38 : vector<8x1xf32>
    %40 = arith.mulf %33, %38 : vector<8x1xf32>
    %41 = arith.mulf %35, %38 : vector<8x1xf32>
    %42 = vector.broadcast %39 : vector<8x1xf32> to vector<8x32xf32>
    %43 = arith.mulf %42, %0 : vector<8x32xf32>
    %44 = vector.broadcast %40 : vector<8x1xf32> to vector<8x32xf32>
    %45 = arith.mulf %44, %1 : vector<8x32xf32>
    %46 = arith.addf %43, %45 : vector<8x32xf32>
    %47 = vector.broadcast %41 : vector<8x1xf32> to vector<8x32xf32>
    %48 = arith.mulf %47, %2 : vector<8x32xf32>
    %49 = arith.addf %46, %48 : vector<8x32xf32>
    %c0_10 = arith.constant 0 : index
    %c0_11 = arith.constant 0 : index
    %50 = vector.load %arg6[%c0_10, %c0_11] : memref<32x128xf32, #tpu.memory_space<vmem>>, vector<32x128xf32>
    %cst_12 = arith.constant dense<0.000000e+00> : vector<8x128xf32>
    %51 = tpu.matmul %0, %50, %cst_12 {dimension_numbers = #tpu.dot_dimension_numbers<[1], [0], [0], [1], [0, 0, 1, 1], [], []>} : vector<8x32xf32>, vector<32x128xf32>, vector<8x128xf32> -> vector<8x128xf32>
    %c0_13 = arith.constant 0 : index
    %c0_14 = arith.constant 0 : index
    %52 = vector.load %arg7[%c0_13, %c0_14] : memref<32x128xf32, #tpu.memory_space<vmem>>, vector<32x128xf32>
    %cst_15 = arith.constant dense<0.000000e+00> : vector<8x128xf32>
    %53 = tpu.matmul %49, %52, %cst_15 {dimension_numbers = #tpu.dot_dimension_numbers<[1], [0], [0], [1], [0, 0, 1, 1], [], []>} : vector<8x32xf32>, vector<32x128xf32>, vector<8x128xf32> -> vector<8x128xf32>
    %54 = arith.addf %51, %53 : vector<8x128xf32>
    %55 = vector.extract_strided_slice %54 {offsets = [0, 0], sizes = [8, 8], strides = [1, 1]} : vector<8x128xf32> to vector<8x8xf32>
    %c0_16 = arith.constant 0 : index
    %c0_17 = arith.constant 0 : index
    %56 = vector.load %arg8[%c0_16, %c0_17] : memref<1x8xf32, #tpu.memory_space<vmem>>, vector<1x8xf32>
    %57 = vector.broadcast %56 : vector<1x8xf32> to vector<8x8xf32>
    %58 = arith.addf %55, %57 : vector<8x8xf32>
    %c0_18 = arith.constant 0 : index
    %c0_19 = arith.constant 0 : index
    %59 = vector.load %arg9[%c0_18, %c0_19] : memref<8x8xf32, #tpu.memory_space<vmem>>, vector<8x8xf32>
    tpu.vector_store %arg9[%c0_18, %c0_19], %58 {strides = array<i32>} : memref<8x8xf32, #tpu.memory_space<vmem>>, vector<8x8xf32>,
    return
  }
  func.func @transform_0(%arg0: i32) -> (i32, i32) {
    %c0_i32 = arith.constant 0 : i32
    %c0_i32_0 = arith.constant 0 : i32
    return %arg0, %c0_i32 : i32, i32
  }
  func.func @transform_1(%arg0: i32) -> (i32, i32) {
    %c0_i32 = arith.constant 0 : i32
    %c0_i32_0 = arith.constant 0 : i32
    return %arg0, %c0_i32 : i32, i32
  }
  func.func @transform_2(%arg0: i32) -> (i32, i32) {
    %c0_i32 = arith.constant 0 : i32
    %c0_i32_0 = arith.constant 0 : i32
    return %arg0, %c0_i32 : i32, i32
  }
  func.func @transform_3(%arg0: i32) -> (i32, i32) {
    %c0_i32 = arith.constant 0 : i32
    %c0_i32_0 = arith.constant 0 : i32
    %c0_i32_1 = arith.constant 0 : i32
    return %c0_i32, %c0_i32_0 : i32, i32
  }
  func.func @transform_4(%arg0: i32) -> i32 {
    %c0_i32 = arith.constant 0 : i32
    %c0_i32_0 = arith.constant 0 : i32
    return %c0_i32 : i32
  }
  func.func @transform_5(%arg0: i32) -> (i32, i32) {
    %c0_i32 = arith.constant 0 : i32
    %c0_i32_0 = arith.constant 0 : i32
    %c0_i32_1 = arith.constant 0 : i32
    return %c0_i32, %c0_i32_0 : i32, i32
  }
  func.func @transform_6(%arg0: i32) -> (i32, i32) {
    %c0_i32 = arith.constant 0 : i32
    %c0_i32_0 = arith.constant 0 : i32
    %c0_i32_1 = arith.constant 0 : i32
    return %c0_i32, %c0_i32_0 : i32, i32
  }
  func.func @transform_7(%arg0: i32) -> (i32, i32) {
    %c0_i32 = arith.constant 0 : i32
    %c0_i32_0 = arith.constant 0 : i32
    %c0_i32_1 = arith.constant 0 : i32
    return %c0_i32, %c0_i32_0 : i32, i32
  }
  func.func @transform_8(%arg0: i32) -> (i32, i32) {
    %c0_i32 = arith.constant 0 : i32
    %c0_i32_0 = arith.constant 0 : i32
    return %arg0, %c0_i32 : i32, i32
  }
}

</mosaic_0001>

<llo_original>
// kernel: tpu_custom_call.1
$region0: #{tpu_custom_call.1}
  #allocation0 [shape = 'u32[]', space=smem, size = 0x4, offset = 0x4, fixed_abs, tag = 'smem constant byte address 0x4 - core index']
  #allocation1 [shape = 'u32[72,128]{1,0:T(1,128)}', space=vmem, size = 0x9000, scoped, tag = 'internal scratch']
  %s0 = inlined_call_operand.hbm [shape: f32[8,32], index: 0, kind: input, shape index: {}]
  %s1 = inlined_call_operand.hbm [shape: f32[8,32], index: 1, kind: input, shape index: {}]
  %s2 = inlined_call_operand.hbm [shape: f32[8,32], index: 2, kind: input, shape index: {}]
  %s3 = inlined_call_operand.hbm [shape: f32[3,32], index: 3, kind: input, shape index: {}]
  %s4 = inlined_call_operand.vmem [shape: f32[3], index: 4, kind: input, shape index: {}]
  %s5 = inlined_call_operand.hbm [shape: f32[32,128], index: 5, kind: input, shape index: {}]
  %s6 = inlined_call_operand.hbm [shape: f32[32,128], index: 6, kind: input, shape index: {}]
  %s7 = inlined_call_operand.vmem [shape: f32[1,8], index: 7, kind: input, shape index: {}]
  %s8 = inlined_call_operand.hbm [shape: f32[8,8], index: 8, kind: output, shape index: {}]
  %s9 = sld [smem:[#allocation0]]
  $region70: #{tpu_custom_call.1} parent=0
    _
  %s11 = ssub.s32 1, %s9
  %s12 = scalar_select 0, %s11, %s9
  $region1: #{tpu_custom_call.1} parent=0
    #allocation2 [shape = 'u8[4096]{0}', space=vmem, size = 0x1000, scoped, tag = 'input window, operand 0, single buffered']
    #allocation3 [shape = 's32[1]{0}', space=sflag, size = 0x4, scoped, tag = 'scoped memory for tpu_custom_call.1']
    #allocation4 [shape = 's32[1]{0}', space=sflag, size = 0x4, scoped, tag = 'scoped memory for tpu_custom_call.1']
    #allocation5 [shape = 's32[1]{0}', space=sflag, size = 0x4, scoped, tag = 'scoped memory for tpu_custom_call.1']
    #allocation6 [shape = 'u8[4096]{0}', space=vmem, size = 0x1000, scoped, tag = 'input window, operand 1, single buffered']
    #allocation7 [shape = 's32[1]{0}', space=sflag, size = 0x4, scoped, tag = 'scoped memory for tpu_custom_call.1']
    #allocation8 [shape = 'u8[4096]{0}', space=vmem, size = 0x1000, scoped, tag = 'input window, operand 2, single buffered']
    #allocation9 [shape = 'u8[2048]{0}', space=vmem, size = 0x800, scoped, tag = 'input window, operand 3, single buffered']
    #allocation10 [shape = 's32[1]{0}', space=sflag, size = 0x4, scoped, tag = 'scoped memory for tpu_custom_call.1']
    #allocation11 [shape = 'u8[512]{0}', space=smem, size = 0x200, scoped, tag = 'input window, operand 4, single buffered']
    #allocation12 [shape = 'u8[16384]{0}', space=vmem, size = 0x4000, scoped, tag = 'input window, operand 5, single buffered']
    #allocation13 [shape = 'u8[16384]{0}', space=vmem, size = 0x4000, scoped, tag = 'input window, operand 6, single buffered']
    #allocation14 [shape = 's32[1]{0}', space=sflag, size = 0x4, scoped, tag = 'scoped memory for tpu_custom_call.1']
    #allocation15 [shape = 'u8[4096]{0}', space=vmem, size = 0x1000, scoped, tag = 'output window, operand 0, single buffered']
    %13 = vsyncpa [#allocation3], 0
    %14 = vsyncpa [#allocation7], 0
    %15 = vsyncpa [#allocation10], 0
    %16 = vsyncpa [#allocation5], 0
    %17 = vsyncpa [#allocation14], 0
    %18 = vsyncpa [#allocation4], 0
    // Predicated region
    $region2: #{tpu_custom_call.1} parent=1 // pred_check
      _
    $region3: #{tpu_custom_call.1} parent=1 // pred_check_branch
      %20 = sbr.rel (0) target = $region5
    $region4: #{tpu_custom_call.1} parent=1 // pred_region
      %22 = vsyncadd [#allocation3], 0
      %s24 = sshll.u32 %s0, 4
      %s25 = int_to_ptr.hbm [resolvable:$true] %s24
      %s26 = sshll.u32 [#allocation2], 4
      %s27 = int_to_ptr.vmem [resolvable:$true] %s26
      %29 = dma.hbm_to_vmem [thread:$0]  %s25, 128, %s27, [#allocation3]
    $region5: #{tpu_custom_call.1} parent=1 // pred_fallthru
      _
    // Predicated region
    $region6: #{tpu_custom_call.1} parent=1 // pred_check
      _
    $region7: #{tpu_custom_call.1} parent=1 // pred_check_branch
      %31 = sbr.rel (0) target = $region9
    $region8: #{tpu_custom_call.1} parent=1 // pred_region
      %33 = vsyncadd [#allocation7], 0
      %s35 = sshll.u32 %s1, 4
      %s36 = int_to_ptr.hbm [resolvable:$true] %s35
      %s37 = sshll.u32 [#allocation6], 4
      %s38 = int_to_ptr.vmem [resolvable:$true] %s37
      %40 = dma.hbm_to_vmem [thread:$0]  %s36, 128, %s38, [#allocation7]
    $region9: #{tpu_custom_call.1} parent=1 // pred_fallthru
      _
    // Predicated region
    $region10: #{tpu_custom_call.1} parent=1 // pred_check
      _
    $region11: #{tpu_custom_call.1} parent=1 // pred_check_branch
      %42 = sbr.rel (0) target = $region13
    $region12: #{tpu_custom_call.1} parent=1 // pred_region
      %44 = vsyncadd [#allocation7], 0
      %s46 = sshll.u32 %s2, 4
      %s47 = int_to_ptr.hbm [resolvable:$true] %s46
      %s48 = sshll.u32 [#allocation8], 4
      %s49 = int_to_ptr.vmem [resolvable:$true] %s48
      %51 = dma.hbm_to_vmem [thread:$0]  %s47, 128, %s49, [#allocation7]
    $region13: #{tpu_custom_call.1} parent=1 // pred_fallthru
      _
    // Predicated region
    $region14: #{tpu_custom_call.1} parent=1 // pred_check
      _
    $region15: #{tpu_custom_call.1} parent=1 // pred_check_branch
      %53 = sbr.rel (0) target = $region17
    $region16: #{tpu_custom_call.1} parent=1 // pred_region
      %55 = vsyncadd [#allocation10], 0
      %s57 = sshll.u32 %s3, 4
      %s58 = int_to_ptr.hbm [resolvable:$true] %s57
      %s59 = sshll.u32 [#allocation9], 4
      %s60 = int_to_ptr.vmem [resolvable:$true] %s59
      %62 = dma.hbm_to_vmem [thread:$0]  %s58, 64, %s60, [#allocation10]
    $region17: #{tpu_custom_call.1} parent=1 // pred_fallthru
      _
    // Predicated region
    $region18: #{tpu_custom_call.1} parent=1 // pred_check
      _
    $region19: #{tpu_custom_call.1} parent=1 // pred_check_branch
      %64 = sbr.rel (0) target = $region21
    $region20: #{tpu_custom_call.1} parent=1 // pred_region
      %66 = vsyncadd [#allocation5], 0
      %s68 = sshll.u32 %s4, 4
      %s69 = int_to_ptr.vmem [resolvable:$true] %s68
      %71 = dma.vmem_to_smem %s69, 16, [#allocation11], [#allocation5]
    $region21: #{tpu_custom_call.1} parent=1 // pred_fallthru
      _
    // Predicated region
    $region22: #{tpu_custom_call.1} parent=1 // pred_check
      _
    $region23: #{tpu_custom_call.1} parent=1 // pred_check_branch
      %73 = sbr.rel (0) target = $region25
    $region24: #{tpu_custom_call.1} parent=1 // pred_region
      %75 = vsyncadd [#allocation10], 0
      %s76 = sshll.u32 %s5, 4
      %s77 = int_to_ptr.hbm [resolvable:$true] %s76
      %s78 = sshll.u32 [#allocation12], 4
      %s79 = int_to_ptr.vmem [resolvable:$true] %s78
      %84 = dma.hbm_to_vmem [thread:$0]  %s77, 512, %s79, [#allocation10], 128, 128, 8
    $region25: #{tpu_custom_call.1} parent=1 // pred_fallthru
      _
    // Predicated region
    $region26: #{tpu_custom_call.1} parent=1 // pred_check
      _
    $region27: #{tpu_custom_call.1} parent=1 // pred_check_branch
      %86 = sbr.rel (0) target = $region29
    $region28: #{tpu_custom_call.1} parent=1 // pred_region
      %88 = vsyncadd [#allocation14], 0
      %s89 = sshll.u32 %s6, 4
      %s90 = int_to_ptr.hbm [resolvable:$true] %s89
      %s91 = sshll.u32 [#allocation13], 4
      %s92 = int_to_ptr.vmem [resolvable:$true] %s91
      %97 = dma.hbm_to_vmem [thread:$0]  %s90, 512, %s92, [#allocation14], 128, 128, 8
    $region29: #{tpu_custom_call.1} parent=1 // pred_fallthru
      _
    // Predicated region
    $region30: #{tpu_custom_call.1} parent=1 // pred_check
      _
    $region31: #{tpu_custom_call.1} parent=1 // pred_check_branch
      %99 = sbr.rel (0) target = $region33
    $region32: #{tpu_custom_call.1} parent=1 // pred_region
      _
    $region33: #{tpu_custom_call.1} parent=1 // pred_fallthru
      _
    // Predicated region
    $region34: #{tpu_custom_call.1} parent=1 // pred_check
      _
    $region35: #{tpu_custom_call.1} parent=1 // pred_check_branch
      %101 = sbr.rel (0) target = $region37
    $region36: #{tpu_custom_call.1} parent=1 // pred_region
      %103 = dma.done [#allocation3], 128
    $region37: #{tpu_custom_call.1} parent=1 // pred_fallthru
      _
    // Predicated region
    $region38: #{tpu_custom_call.1} parent=1 // pred_check
      _
    $region39: #{tpu_custom_call.1} parent=1 // pred_check_branch
      %105 = sbr.rel (0) target = $region41
    $region40: #{tpu_custom_call.1} parent=1 // pred_region
      %107 = dma.done [#allocation7], 128
    $region41: #{tpu_custom_call.1} parent=1 // pred_fallthru
      _
    // Predicated region
    $region42: #{tpu_custom_call.1} parent=1 // pred_check
      _
    $region43: #{tpu_custom_call.1} parent=1 // pred_check_branch
      %109 = sbr.rel (0) target = $region45
    $region44: #{tpu_custom_call.1} parent=1 // pred_region
      %111 = dma.done [#allocation7], 128
    $region45: #{tpu_custom_call.1} parent=1 // pred_fallthru
      _
    // Predicated region
    $region46: #{tpu_custom_call.1} parent=1 // pred_check
      _
    $region47: #{tpu_custom_call.1} parent=1 // pred_check_branch
      %113 = sbr.rel (0) target = $region49
    $region48: #{tpu_custom_call.1} parent=1 // pred_region
      %115 = dma.done [#allocation10], 64
    $region49: #{tpu_custom_call.1} parent=1 // pred_fallthru
      _
    // Predicated region
    $region50: #{tpu_custom_call.1} parent=1 // pred_check
      _
    $region51: #{tpu_custom_call.1} parent=1 // pred_check_branch
      %117 = sbr.rel (0) target = $region53
    $region52: #{tpu_custom_call.1} parent=1 // pred_region
      %119 = dma.done [#allocation5], 16
    $region53: #{tpu_custom_call.1} parent=1 // pred_fallthru
      _
    // Predicated region
    $region54: #{tpu_custom_call.1} parent=1 // pred_check
      _
    $region55: #{tpu_custom_call.1} parent=1 // pred_check_branch
      %121 = sbr.rel (0) target = $region57
    $region56: #{tpu_custom_call.1} parent=1 // pred_region
      %123 = dma.done [#allocation10], 512
    $region57: #{tpu_custom_call.1} parent=1 // pred_fallthru
      _
    // Predicated region
    $region58: #{tpu_custom_call.1} parent=1 // pred_check
      _
    $region59: #{tpu_custom_call.1} parent=1 // pred_check_branch
      %125 = sbr.rel (0) target = $region61
    $region60: #{tpu_custom_call.1} parent=1 // pred_region
      %127 = dma.done [#allocation14], 512
    $region61: #{tpu_custom_call.1} parent=1 // pred_fallthru
      _
    %128 = sfence
    %v129 = vld [vmem:[#allocation2] sm:$0xff]
    %v130 = vld [vmem:[#allocation6] sm:$0xff]
    %v131 = vld [vmem:[#allocation8] sm:$0xff]
    %v132 = vld [vmem:[#allocation9] sm:$0x7]
    %v133 = vperm.slane %v132, 0
    %v134 = vmul.f32 %v129, %v133
    %vm135 = vcmask 261120
    %v136 = vsel %vm135, %v134, 0.0
    %137 = vadd.xlane.f32.xlu0 %v136
    %v138 = vpop.xlane.xlu0 %137
    %s139 = sld [smem:[#allocation11]]
    %v140 = vstv %s139
    %v141 = vadd.f32 %v138, %v140
    %v142 = vperm.slane %v132, 1
    %v143 = vmul.f32 %v130, %v142
    %v144 = vsel %vm135, %v143, 0.0
    %145 = vadd.xlane.f32.xlu0 %v144
    %v146 = vpop.xlane.xlu0 %145
    %s147 = sld [smem:[#allocation11 + $0x1]]
    %v148 = vstv %s147
    %v149 = vadd.f32 %v146, %v148
    %v150 = vperm.slane %v132, 2
    %v151 = vmul.f32 %v131, %v150
    %v152 = vsel %vm135, %v151, 0.0
    %153 = vadd.xlane.f32.xlu0 %v152
    %v154 = vpop.xlane.xlu0 %153
    %s155 = sld [smem:[#allocation11 + $0x2]]
    %v156 = vstv %s155
    %v157 = vadd.f32 %v154, %v156
    %v158 = vmax.f32 %v141, %v149
    %v159 = vmax.f32 %v158, %v157
    %v160 = vsub.f32 %v141, %v159
    %v161 = vmul.f32 %v160, 1.442695
    %v162 = vpow.pop %v161
    %v163 = vsub.f32 %v149, %v159
    %v164 = vmul.f32 %v163, 1.442695
    %v165 = vpow.pop %v164
    %v166 = vsub.f32 %v157, %v159
    %v167 = vmul.f32 %v166, 1.442695
    %v168 = vpow.pop %v167
    %v169 = vadd.f32 %v162, %v165
    %v170 = vadd.f32 %v169, %v168
    %v171 = vrcp.pop %v170
    %v172 = vmul.f32 %v170, %v171
    %v173 = vsub.f32 1.0, %v172
    %v174 = vmul.f32 %v171, %v173
    %v175 = vadd.f32 %v171, %v174
    %vm176 = vweird.f32 %v170
    %vm177 = vweird.f32 %v171
    %vm178 = vmor %vm176, %vm177
    %v179 = vsel %vm178, %v171, %v175
    %v180 = vand.u32 2147483647, %v170
    %vm181 = vcmp.eq.f32.partialorder %v180, 8.507059e+37
    %v182 = vand.u32 %v170, 2147483648
    %v183 = vor.u32 1.1754944e-38, %v182
    %v184 = vsel %vm181, %v183, %v179
    %v185 = vmul.f32 %v162, %v184
    %v186 = vmul.f32 %v165, %v184
    %v187 = vmul.f32 %v168, %v184
    %v188 = vmul.f32 %v185, %v129
    %v189 = vmul.f32 %v186, %v130
    %v190 = vadd.f32 %v188, %v189
    %v191 = vmul.f32 %v187, %v131
    %v192 = vadd.f32 %v190, %v191
    %v193 = vld [vmem:[#allocation12] sm:$0xff]
    %v194 = vld [vmem:[#allocation12 + $0x8] sm:$0xff]
    %v195 = vld [vmem:[#allocation12 + $0x10] sm:$0xff]
    %v196 = vld [vmem:[#allocation12 + $0x18] sm:$0xff]
    %v197 = vld [vmem:[#allocation13] sm:$0xff]
    %v198 = vld [vmem:[#allocation13 + $0x8] sm:$0xff]
    %v199 = vld [vmem:[#allocation13 + $0x10] sm:$0xff]
    %v200 = vld [vmem:[#allocation13 + $0x18] sm:$0xff]
    %v202 = vsel %vm135, %v192, 0
    %204 = vmatpush.msra.mxu0 0.0
    %205 = vmatpush.msra.mxu0 0.0
    %206 = vmatpush.msra.mxu0 0.0
    %207 = vmatpush.msra.mxu0 0.0
    %208 = vmatpush.msra.mxu0 0.0
    %209 = vmatpush.msra.mxu0 0.0
    %210 = vmatpush.msra.mxu0 0.0
    %211 = vmatpush.msra.mxu0 0.0
    %212 = vmatpush.msra.mxu0 0.0
    %213 = vmatpush.msra.mxu0 0.0
    %214 = vmatpush.msra.mxu0 0.0
    %215 = vmatpush.msra.mxu0 0.0
    %216 = vmatpush.msra.mxu0 %v200
    %217 = vmatpush.msra.mxu0 %v199
    %218 = vmatpush.msra.mxu0 %v198
    %219 = vmatpush.msra.mxu0 %v197
    %220 = vmatmul.f32.gmra.mxu0 %v202
    %v221 = vpop.f32.mrf.mxu0
    %v222 = vadd.f32 0.0, %v221
    %223 = vdwg.mxu0
    %v225 = vsel %vm135, %v129, 0
    %227 = vmatpush.msra.mxu0 0.0
    %228 = vmatpush.msra.mxu0 0.0
    %229 = vmatpush.msra.mxu0 0.0
    %230 = vmatpush.msra.mxu0 0.0
    %231 = vmatpush.msra.mxu0 0.0
    %232 = vmatpush.msra.mxu0 0.0
    %233 = vmatpush.msra.mxu0 0.0
    %234 = vmatpush.msra.mxu0 0.0
    %235 = vmatpush.msra.mxu0 0.0
    %236 = vmatpush.msra.mxu0 0.0
    %237 = vmatpush.msra.mxu0 0.0
    %238 = vmatpush.msra.mxu0 0.0
    %239 = vmatpush.msra.mxu0 %v196
    %240 = vmatpush.msra.mxu0 %v195
    %241 = vmatpush.msra.mxu0 %v194
    %242 = vmatpush.msra.mxu0 %v193
    %243 = vmatmul.f32.gmra.mxu0 %v225
    %v244 = vpop.f32.mrf.mxu0
    %v245 = vadd.f32 %v222, %v244
    %246 = vdwg.mxu0
    %v247 = vld [vmem:[%s7] sm:$0x1]
    %v249 = vperm.slane %v247, 0
    %v251 = vadd.f32 %v245, %v249
    %vm252 = vcmask 64512
    %253 = vst.msk [vmem:[#allocation15] sm:$0xff] %vm252, %v251
    // Predicated region
    $region62: #{tpu_custom_call.1} parent=1 // pred_check
      _
    $region63: #{tpu_custom_call.1} parent=1 // pred_check_branch
      %255 = sbr.rel (0) target = $region65
    $region64: #{tpu_custom_call.1} parent=1 // pred_region
      %257 = vsyncadd [#allocation4], 0
      %s259 = sshll.u32 [#allocation15], 4
      %s260 = int_to_ptr.vmem [resolvable:$true] %s259
      %s261 = sshll.u32 %s8, 4
      %s262 = int_to_ptr.hbm [resolvable:$true] %s261
      %264 = dma.vmem_to_hbm [thread:$0]  %s260, 128, %s262, [#allocation4]
    $region65: #{tpu_custom_call.1} parent=1 // pred_fallthru
      _
    // Predicated region
    $region66: #{tpu_custom_call.1} parent=1 // pred_check
      _
    $region67: #{tpu_custom_call.1} parent=1 // pred_check_branch
      %266 = sbr.rel (0) target = $region69
    $region68: #{tpu_custom_call.1} parent=1 // pred_region
      %268 = dma.done [#allocation4], 128
    $region69: #{tpu_custom_call.1} parent=1 // pred_fallthru
      _
    %269 = vsyncpa [#allocation3], 1
    %270 = vsyncpa [#allocation7], 1
    %271 = vsyncpa [#allocation10], 1
    %272 = vsyncpa [#allocation14], 1
    %273 = vsyncpa [#allocation4], 1
    %274 = vsyncpa [#allocation5], 1

</llo_original>
